<compile_context>
chip_gen: v6e
topology: v6e:2x2x1
jax: 0.10.0
libtpu: 0.0.40
codegen_flags: <defaults>
</compile_context>

<pallas_src>
import functools

import jax
import jax.numpy as jnp
from jax.experimental import pallas as pl
from jax.experimental.pallas import tpu as pltpu

LN_EPS = 1e-5  # PyTorch nn.LayerNorm default


def _ffn_kernel(x_ref, w1_ref, b1_ref, w2_ref, b2_ref, g_ref, beta_ref,
                o_ref, acc_ref, *, compute_dtype):
    kf = pl.program_id(1)
    nf = pl.num_programs(1)

    @pl.when(kf == 0)
    def _():
        acc_ref[...] = jnp.zeros_like(acc_ref)

    x_f32 = x_ref[...]                                   # (TM, H) f32
    x_c = x_f32.astype(compute_dtype)

    # fc1 (partial over this TF slice of F) + bias + ReLU.  The contraction is
    # over H (not tiled), so the ReLU on each TF slice is exact.
    h = jnp.dot(x_c, w1_ref[...], preferred_element_type=jnp.float32)
    h = jnp.maximum(h + b1_ref[...], 0.0)                # (TM, TF) f32

    # fc2 partial product accumulated over the F grid axis.
    acc_ref[...] += jnp.dot(h.astype(compute_dtype), w2_ref[...],
                            preferred_element_type=jnp.float32)

    @pl.when(kf == nf - 1)
    def _():
        # bias2 + residual (f32 x) + LayerNorm over hidden (lane) axis.
        z = acc_ref[...] + b2_ref[...] + x_f32
        mean = jnp.mean(z, axis=-1, keepdims=True)
        zc = z - mean
        var = jnp.mean(zc * zc, axis=-1, keepdims=True)
        inv = jax.lax.rsqrt(var + LN_EPS)
        o_ref[...] = ((zc * inv) * g_ref[...] + beta_ref[...]).astype(o_ref.dtype)


def _pick_tf(F, tf_target):
    """Pick an F tile that divides F exactly (contraction axis must not pad)."""
    if F <= tf_target:
        return F
    for cand in (tf_target, 2048, 1024, 512, 256, 128):
        if cand <= F and F % cand == 0:
            return cand
    return F  # fall back to fully-resident weights


def poswise_ffn(x, w1, b1, w2, b2, gamma, beta, *,
                tm=512, tf=2048, compute_dtype=jnp.bfloat16):
    """x: (batch, seq, hidden) f32; w1: (H, 4H); w2: (4H, H). Returns (B,S,H)."""
    B, S, H = x.shape
    F = w1.shape[1]
    M = B * S

    tm = min(tm, M)                 # 512 is a multiple of 8; tm==M also legal
    tf = _pick_tf(F, tf)
    n_m = pl.cdiv(M, tm)
    n_f = pl.cdiv(F, tf)

    x2 = x.reshape(M, H)
    w1_c = w1.astype(compute_dtype)
    w2_c = w2.astype(compute_dtype)
    b1_ = b1.reshape(1, F).astype(jnp.float32)
    b2_ = b2.reshape(1, H).astype(jnp.float32)
    g_ = gamma.reshape(1, H).astype(jnp.float32)
    be_ = beta.reshape(1, H).astype(jnp.float32)

    dsize = jnp.dtype(compute_dtype).itemsize
    cost = pl.CostEstimate(
        flops=4 * M * H * F,                      # two matmuls
        transcendentals=M,                        # rsqrt per token
        bytes_accessed=2 * 4 * M * H + 2 * H * F * dsize,
    )

    kernel = functools.partial(_ffn_kernel, compute_dtype=compute_dtype)

    out = pl.pallas_call(
        kernel,
        out_shape=jax.ShapeDtypeStruct((M, H), x.dtype),
        grid_spec=pltpu.PrefetchScalarGridSpec(
            num_scalar_prefetch=0,
            grid=(n_m, n_f),
            in_specs=[
                pl.BlockSpec((tm, H), lambda i, kf: (i, 0)),   # x   (streamed over M)
                pl.BlockSpec((H, tf), lambda i, kf: (0, kf)),  # w1  (resident if n_f==1)
                pl.BlockSpec((1, tf), lambda i, kf: (0, kf)),  # b1
                pl.BlockSpec((tf, H), lambda i, kf: (kf, 0)),  # w2
                pl.BlockSpec((1, H), lambda i, kf: (0, 0)),    # b2
                pl.BlockSpec((1, H), lambda i, kf: (0, 0)),    # gamma
                pl.BlockSpec((1, H), lambda i, kf: (0, 0)),    # beta
            ],
            out_specs=pl.BlockSpec((tm, H), lambda i, kf: (i, 0)),
            scratch_shapes=[pltpu.VMEM((tm, H), jnp.float32)],  # fc2 accumulator
        ),
        compiler_params=pltpu.CompilerParams(
            dimension_semantics=("parallel", "arbitrary"),
            vmem_limit_bytes=64 * 1024 * 1024,
        ),
        cost_estimate=cost,
    )(x2, w1_c, b1_, w2_c, b2_, g_, be_)
    return out.reshape(B, S, H)


def _layernorm(z, gamma, beta):
    mean = jnp.mean(z, axis=-1, keepdims=True)
    var = jnp.mean((z - mean) ** 2, axis=-1, keepdims=True)
    return (z - mean) / jnp.sqrt(var + LN_EPS) * gamma + beta


def _reference_f32(x, w1, b1, w2, b2, gamma, beta):
    h = jnp.maximum(x @ w1 + b1, 0.0)
    y = h @ w2 + b2
    return _layernorm(y + x, gamma, beta)


def _reference_bf16(x, w1, b1, w2, b2, gamma, beta):
    """Same numerics as the kernel: bf16 matmul operands, f32 accumulation."""
    xb = x.astype(jnp.bfloat16)
    h = jnp.dot(xb, w1.astype(jnp.bfloat16),
                preferred_element_type=jnp.float32) + b1
    h = jnp.maximum(h, 0.0)
    y = jnp.dot(h.astype(jnp.bfloat16), w2.astype(jnp.bfloat16),
                preferred_element_type=jnp.float32) + b2
    return _layernorm(y + x, gamma, beta)


if __name__ == "__main__":
    batch, seq, hidden = 2, 8, 32
    ff = 4 * hidden  # module uses 4*hidden_size regardless of ff_size arg

    key = jax.random.PRNGKey(0)
    kx, k1, k2, k3, k4 = jax.random.split(key, 5)

    x = jax.random.normal(kx, (batch, seq, hidden), dtype=jnp.float32)
    # deterministic synthetic params (no checkpoint load)
    w1 = jax.random.normal(k1, (hidden, ff), dtype=jnp.float32) * 0.05
    b1 = jax.random.normal(k2, (ff,), dtype=jnp.float32) * 0.01
    w2 = jax.random.normal(k3, (ff, hidden), dtype=jnp.float32) * 0.05
    b2 = jax.random.normal(k4, (hidden,), dtype=jnp.float32) * 0.01
    gamma = jnp.ones((hidden,), dtype=jnp.float32)
    beta = jnp.zeros((hidden,), dtype=jnp.float32)

    out = poswise_ffn(x, w1, b1, w2, b2, gamma, beta)
    out = jax.block_until_ready(out)
    assert out.shape == (batch, seq, hidden)

    # Exact-numerics reference (bf16 matmuls, f32 accumulation / LN).
    ref_bf16 = _reference_bf16(x, w1, b1, w2, b2, gamma, beta)
    assert jnp.allclose(out, ref_bf16, atol=2e-3, rtol=2e-3), \
        "mismatch vs bf16-matmul reference"

    # Full-f32 reference: bf16 matmul operands only cost a small tolerance.
    ref_f32 = _reference_f32(x, w1, b1, w2, b2, gamma, beta)
    assert jnp.allclose(out, ref_f32, atol=5e-2, rtol=5e-2), \
        "mismatch vs f32 reference"

    print("KERNEL_OK")
</pallas_src>

<mosaic_0001>
module attributes {stable_mosaic.version = 11 : i64} {
  func.func @_ffn_kernel(%arg0: i32, %arg1: i32, %arg2: memref<16x32xf32, #tpu.memory_space<vmem>>, %arg3: memref<32x128xbf16, #tpu.memory_space<vmem>>, %arg4: memref<1x128xf32, #tpu.memory_space<vmem>>, %arg5: memref<128x32xbf16, #tpu.memory_space<vmem>>, %arg6: memref<1x32xf32, #tpu.memory_space<vmem>>, %arg7: memref<1x32xf32, #tpu.memory_space<vmem>>, %arg8: memref<1x32xf32, #tpu.memory_space<vmem>>, %arg9: memref<16x32xf32, #tpu.memory_space<vmem>>, %arg10: memref<16x32xf32, #tpu.memory_space<vmem>>) attributes {dimension_semantics = [#tpu.dimension_semantics<parallel>, #tpu.dimension_semantics<arbitrary>], iteration_bounds = array<i64: 1, 1>, scalar_prefetch = 0 : i64, scratch_operands = 1 : i64, tpu.core_type = #tpu.core_type<tc>, window_params = [{transform_indices = @transform_0, window_bounds = array<i64: 16, 32>}, {transform_indices = @transform_1, window_bounds = array<i64: 32, 128>}, {transform_indices = @transform_2, window_bounds = array<i64: 1, 128>}, {transform_indices = @transform_3, window_bounds = array<i64: 128, 32>}, {pipeline_mode = #tpu.pipeline_mode<synchronous>, transform_indices = @transform_4, window_bounds = array<i64: 1, 32>}, {pipeline_mode = #tpu.pipeline_mode<synchronous>, transform_indices = @transform_5, window_bounds = array<i64: 1, 32>}, {pipeline_mode = #tpu.pipeline_mode<synchronous>, transform_indices = @transform_6, window_bounds = array<i64: 1, 32>}, {transform_indices = @transform_7, window_bounds = array<i64: 16, 32>}]} {
    %c0_i32 = arith.constant 0 : i32
    %0 = arith.cmpi eq, %arg1, %c0_i32 : i32
    %1 = arith.extui %0 : i1 to i32
    %c0_i32_0 = arith.constant 0 : i32
    %2 = arith.cmpi ne, %1, %c0_i32_0 : i32
    scf.if %2 {
      %cst_16 = arith.constant 0.000000e+00 : f32
      %21 = vector.broadcast %cst_16 : f32 to vector<16x32xf32>
      %c0_17 = arith.constant 0 : index
      %c0_18 = arith.constant 0 : index
      %22 = vector.load %arg10[%c0_17, %c0_18] : memref<16x32xf32, #tpu.memory_space<vmem>>, vector<16x32xf32>
      tpu.vector_store %arg10[%c0_17, %c0_18], %21 {strides = array<i32>} : memref<16x32xf32, #tpu.memory_space<vmem>>, vector<16x32xf32>,
    } else {
    }
    %c0 = arith.constant 0 : index
    %c0_1 = arith.constant 0 : index
    %3 = vector.load %arg2[%c0, %c0_1] : memref<16x32xf32, #tpu.memory_space<vmem>>, vector<16x32xf32>
    %4 = arith.truncf %3 : vector<16x32xf32> to vector<16x32xbf16>
    %c0_2 = arith.constant 0 : index
    %c0_3 = arith.constant 0 : index
    %5 = vector.load %arg3[%c0_2, %c0_3] : memref<32x128xbf16, #tpu.memory_space<vmem>>, vector<32x128xbf16>
    %cst = arith.constant dense<0.000000e+00> : vector<16x128xf32>
    %6 = tpu.matmul %4, %5, %cst {dimension_numbers = #tpu.dot_dimension_numbers<[1], [0], [0], [1], [0, 0, 1, 1], [], []>} : vector<16x32xbf16>, vector<32x128xbf16>, vector<16x128xf32> -> vector<16x128xf32>
    %c0_4 = arith.constant 0 : index
    %c0_5 = arith.constant 0 : index
    %7 = vector.load %arg4[%c0_4, %c0_5] : memref<1x128xf32, #tpu.memory_space<vmem>>, vector<1x128xf32>
    %8 = vector.broadcast %7 : vector<1x128xf32> to vector<16x128xf32>
    %9 = arith.addf %6, %8 : vector<16x128xf32>
    %cst_6 = arith.constant 0.000000e+00 : f32
    %10 = vector.broadcast %cst_6 : f32 to vector<16x128xf32>
    %11 = arith.maximumf %9, %10 : vector<16x128xf32>
    %c0_7 = arith.constant 0 : index
    %c0_8 = arith.constant 0 : index
    %12 = vector.load %arg10[%c0_7, %c0_8] : memref<16x32xf32, #tpu.memory_space<vmem>>, vector<16x32xf32>
    %13 = arith.truncf %11 : vector<16x128xf32> to vector<16x128xbf16>
    %c0_9 = arith.constant 0 : index
    %c0_10 = arith.constant 0 : index
    %14 = vector.load %arg5[%c0_9, %c0_10] : memref<128x32xbf16, #tpu.memory_space<vmem>>, vector<128x32xbf16>
    %cst_11 = arith.constant dense<0.000000e+00> : vector<16x32xf32>
    %15 = tpu.matmul %13, %14, %cst_11 {dimension_numbers = #tpu.dot_dimension_numbers<[1], [0], [0], [1], [0, 0, 1, 1], [], []>} : vector<16x128xbf16>, vector<128x32xbf16>, vector<16x32xf32> -> vector<16x32xf32>
    %16 = arith.addf %12, %15 : vector<16x32xf32>
    %c0_12 = arith.constant 0 : index
    %c0_13 = arith.constant 0 : index
    %17 = vector.load %arg10[%c0_12, %c0_13] : memref<16x32xf32, #tpu.memory_space<vmem>>, vector<16x32xf32>
    tpu.vector_store %arg10[%c0_12, %c0_13], %16 {strides = array<i32>} : memref<16x32xf32, #tpu.memory_space<vmem>>, vector<16x32xf32>,
    %c0_i32_14 = arith.constant 0 : i32
    %18 = arith.cmpi eq, %arg1, %c0_i32_14 : i32
    %19 = arith.extui %18 : i1 to i32
    %c0_i32_15 = arith.constant 0 : i32
    %20 = arith.cmpi ne, %19, %c0_i32_15 : i32
    scf.if %20 {
      %c0_16 = arith.constant 0 : index
      %c0_17 = arith.constant 0 : index
      %21 = vector.load %arg10[%c0_16, %c0_17] : memref<16x32xf32, #tpu.memory_space<vmem>>, vector<16x32xf32>
      %c0_18 = arith.constant 0 : index
      %c0_19 = arith.constant 0 : index
      %22 = vector.load %arg6[%c0_18, %c0_19] : memref<1x32xf32, #tpu.memory_space<vmem>>, vector<1x32xf32>
      %23 = vector.broadcast %22 : vector<1x32xf32> to vector<16x32xf32>
      %24 = arith.addf %21, %23 : vector<16x32xf32>
      %25 = arith.addf %24, %3 : vector<16x32xf32>
      %cst_20 = arith.constant dense<0.000000e+00> : vector<16xf32>
      %26 = vector.multi_reduction <add>, %25, %cst_20 [1] : vector<16x32xf32> to vector<16xf32>
      %27 = vector.shape_cast %26 : vector<16xf32> to vector<16x1xf32>
      %cst_21 = arith.constant 3.200000e+01 : f32
      %28 = vector.broadcast %cst_21 : f32 to vector<16x1xf32>
      %29 = arith.divf %27, %28 : vector<16x1xf32>
      %30 = vector.broadcast %29 : vector<16x1xf32> to vector<16x32xf32>
      %31 = arith.subf %25, %30 : vector<16x32xf32>
      %32 = arith.mulf %31, %31 : vector<16x32xf32>
      %cst_22 = arith.constant dense<0.000000e+00> : vector<16xf32>
      %33 = vector.multi_reduction <add>, %32, %cst_22 [1] : vector<16x32xf32> to vector<16xf32>
      %34 = vector.shape_cast %33 : vector<16xf32> to vector<16x1xf32>
      %cst_23 = arith.constant 3.200000e+01 : f32
      %35 = vector.broadcast %cst_23 : f32 to vector<16x1xf32>
      %36 = arith.divf %34, %35 : vector<16x1xf32>
      %cst_24 = arith.constant 9.99999974E-6 : f32
      %37 = vector.broadcast %cst_24 : f32 to vector<16x1xf32>
      %38 = arith.addf %36, %37 : vector<16x1xf32>
      %39 = math.rsqrt %38 : vector<16x1xf32>
      %40 = vector.broadcast %39 : vector<16x1xf32> to vector<16x32xf32>
      %41 = arith.mulf %31, %40 : vector<16x32xf32>
      %c0_25 = arith.constant 0 : index
      %c0_26 = arith.constant 0 : index
      %42 = vector.load %arg7[%c0_25, %c0_26] : memref<1x32xf32, #tpu.memory_space<vmem>>, vector<1x32xf32>
      %43 = vector.broadcast %42 : vector<1x32xf32> to vector<16x32xf32>
      %44 = arith.mulf %41, %43 : vector<16x32xf32>
      %c0_27 = arith.constant 0 : index
      %c0_28 = arith.constant 0 : index
      %45 = vector.load %arg8[%c0_27, %c0_28] : memref<1x32xf32, #tpu.memory_space<vmem>>, vector<1x32xf32>
      %46 = vector.broadcast %45 : vector<1x32xf32> to vector<16x32xf32>
      %47 = arith.addf %44, %46 : vector<16x32xf32>
      %c0_29 = arith.constant 0 : index
      %c0_30 = arith.constant 0 : index
      %48 = vector.load %arg9[%c0_29, %c0_30] : memref<16x32xf32, #tpu.memory_space<vmem>>, vector<16x32xf32>
      tpu.vector_store %arg9[%c0_29, %c0_30], %47 {strides = array<i32>} : memref<16x32xf32, #tpu.memory_space<vmem>>, vector<16x32xf32>,
    } else {
    }
    return
  }
  func.func @transform_0(%arg0: i32, %arg1: i32) -> (i32, i32) {
    %c0_i32 = arith.constant 0 : i32
    %c0_i32_0 = arith.constant 0 : i32
    return %arg0, %c0_i32 : i32, i32
  }
  func.func @transform_1(%arg0: i32, %arg1: i32) -> (i32, i32) {
    %c0_i32 = arith.constant 0 : i32
    %c0_i32_0 = arith.constant 0 : i32
    return %c0_i32, %arg1 : i32, i32
  }
  func.func @transform_2(%arg0: i32, %arg1: i32) -> (i32, i32) {
    %c0_i32 = arith.constant 0 : i32
    %c0_i32_0 = arith.constant 0 : i32
    return %c0_i32, %arg1 : i32, i32
  }
  func.func @transform_3(%arg0: i32, %arg1: i32) -> (i32, i32) {
    %c0_i32 = arith.constant 0 : i32
    %c0_i32_0 = arith.constant 0 : i32
    return %arg1, %c0_i32 : i32, i32
  }
  func.func @transform_4(%arg0: i32, %arg1: i32) -> (i32, i32) {
    %c0_i32 = arith.constant 0 : i32
    %c0_i32_0 = arith.constant 0 : i32
    %c0_i32_1 = arith.constant 0 : i32
    return %c0_i32, %c0_i32_0 : i32, i32
  }
  func.func @transform_5(%arg0: i32, %arg1: i32) -> (i32, i32) {
    %c0_i32 = arith.constant 0 : i32
    %c0_i32_0 = arith.constant 0 : i32
    %c0_i32_1 = arith.constant 0 : i32
    return %c0_i32, %c0_i32_0 : i32, i32
  }
  func.func @transform_6(%arg0: i32, %arg1: i32) -> (i32, i32) {
    %c0_i32 = arith.constant 0 : i32
    %c0_i32_0 = arith.constant 0 : i32
    %c0_i32_1 = arith.constant 0 : i32
    return %c0_i32, %c0_i32_0 : i32, i32
  }
  func.func @transform_7(%arg0: i32, %arg1: i32) -> (i32, i32) {
    %c0_i32 = arith.constant 0 : i32
    %c0_i32_0 = arith.constant 0 : i32
    return %arg0, %c0_i32 : i32, i32
  }
}

</mosaic_0001>

<llo_original>
// kernel: tpu_custom_call.1
$region0: #{tpu_custom_call.1}
  #allocation0 [shape = 'u32[]', space=smem, size = 0x4, offset = 0x4, fixed_abs, tag = 'smem constant byte address 0x4 - core index']
  #allocation1 [shape = 'u32[144,128]{1,0:T(1,128)}', space=vmem, size = 0x12000, scoped, tag = 'internal scratch']
  #allocation2 [shape = 'f32[16,32]{1,0:T(8,128)}', space=vmem, size = 0x2000, scoped, tag = 'scratch operand']
  %s0 = inlined_call_operand.vmem [shape: f32[16,32], index: 0, kind: input, shape index: {}]
  %s1 = inlined_call_operand.vmem [shape: bf16[32,128], index: 1, kind: input, shape index: {}]
  %s2 = inlined_call_operand.vmem [shape: f32[1,128], index: 2, kind: input, shape index: {}]
  %s3 = inlined_call_operand.vmem [shape: bf16[128,32], index: 3, kind: input, shape index: {}]
  %s4 = inlined_call_operand.vmem [shape: f32[1,32], index: 4, kind: input, shape index: {}]
  %s5 = inlined_call_operand.vmem [shape: f32[1,32], index: 5, kind: input, shape index: {}]
  %s6 = inlined_call_operand.vmem [shape: f32[1,32], index: 6, kind: input, shape index: {}]
  %s7 = inlined_call_operand.hbm [shape: f32[16,32], index: 7, kind: output, shape index: {}]
  %s8 = sld [smem:[#allocation0]]
  $region46: #{tpu_custom_call.1} parent=0
    _
  %s10 = ssub.s32 1, %s8
  %s11 = scalar_select 0, %s10, %s8
  $region1: #{tpu_custom_call.1} parent=0
    #allocation3 [shape = 'u8[8192]{0}', space=vmem, size = 0x2000, scoped, tag = 'output window, operand 0, single buffered']
    #allocation4 [shape = 's32[1]{0}', space=sflag, size = 0x4, scoped, tag = 'scoped memory for tpu_custom_call.1']
    %12 = vsyncpa [#allocation4], 0
    // Predicated region
    $region2: #{tpu_custom_call.1} parent=1 // pred_check
      _
    $region3: #{tpu_custom_call.1} parent=1 // pred_check_branch
      %14 = sbr.rel (0) target = $region5
    $region4: #{tpu_custom_call.1} parent=1 // pred_region
      _
    $region5: #{tpu_custom_call.1} parent=1 // pred_fallthru
      _
    // Predicated region
    $region6: #{tpu_custom_call.1} parent=1 // pred_check
      _
    $region7: #{tpu_custom_call.1} parent=1 // pred_check_branch
      %16 = sbr.rel (0) target = $region9
    $region8: #{tpu_custom_call.1} parent=1 // pred_region
      _
    $region9: #{tpu_custom_call.1} parent=1 // pred_fallthru
      _
    // Predicated region
    $region10: #{tpu_custom_call.1} parent=1 // pred_check
      _
    $region11: #{tpu_custom_call.1} parent=1 // pred_check_branch
      %18 = sbr.rel (0) target = $region13
    $region12: #{tpu_custom_call.1} parent=1 // pred_region
      _
    $region13: #{tpu_custom_call.1} parent=1 // pred_fallthru
      _
    // Predicated region
    $region14: #{tpu_custom_call.1} parent=1 // pred_check
      _
    $region15: #{tpu_custom_call.1} parent=1 // pred_check_branch
      %20 = sbr.rel (0) target = $region17
    $region16: #{tpu_custom_call.1} parent=1 // pred_region
      _
    $region17: #{tpu_custom_call.1} parent=1 // pred_fallthru
      _
    // Predicated region
    $region18: #{tpu_custom_call.1} parent=1 // pred_check
      _
    $region19: #{tpu_custom_call.1} parent=1 // pred_check_branch
      %22 = sbr.rel (0) target = $region21
    $region20: #{tpu_custom_call.1} parent=1 // pred_region
      _
    $region21: #{tpu_custom_call.1} parent=1 // pred_fallthru
      _
    // Predicated region
    $region22: #{tpu_custom_call.1} parent=1 // pred_check
      _
    $region23: #{tpu_custom_call.1} parent=1 // pred_check_branch
      %24 = sbr.rel (0) target = $region25
    $region24: #{tpu_custom_call.1} parent=1 // pred_region
      _
    $region25: #{tpu_custom_call.1} parent=1 // pred_fallthru
      _
    // Predicated region
    $region26: #{tpu_custom_call.1} parent=1 // pred_check
      _
    $region27: #{tpu_custom_call.1} parent=1 // pred_check_branch
      %26 = sbr.rel (0) target = $region29
    $region28: #{tpu_custom_call.1} parent=1 // pred_region
      _
    $region29: #{tpu_custom_call.1} parent=1 // pred_fallthru
      _
    %p28 = scmp.eq.s32.totalorder 0, 0
    // Predicated region
    $region30: #{tpu_custom_call.1} parent=1 // pred_check
      %p29 = pneg %p28
    $region31: #{tpu_custom_call.1} parent=1 // pred_check_branch
      %31 = sbr.rel (%p29) target = $region33
    $region32: #{tpu_custom_call.1} parent=1 // pred_region
      %vm32 = vcmask 261120
      %33 = vst.msk [vmem:[#allocation2] sm:$0xff] %vm32, 0.0
      %34 = vst.msk [vmem:[#allocation2 + $0x8] sm:$0xff] %vm32, 0.0
    $region33: #{tpu_custom_call.1} parent=1 // pred_fallthru
      _
    %v35 = vld [vmem:[%s0] sm:$0xff]
    %v36 = vld [vmem:[%s0 + $0x8] sm:$0xff]
    %v37 = vpack.c.bf16 %v36, %v35
    %v38 = vld [vmem:[%s1] sm:$0xf]
    %v39 = vld [vmem:[%s1 + $0x4] sm:$0xf]
    %v40 = vld [vmem:[%s1 + $0x8] sm:$0xf]
    %v41 = vld [vmem:[%s1 + $0xc] sm:$0xf]
    %v42 = vld [vmem:[%s2] sm:$0x1]
    %v44 = vlaneseq
    %v45 = vshrl.u32 %v44, 7
    %v46 = vsub.s32 0, %v45
    %v47 = vrot.slane %v42, %v46
    %v53 = vunpack.c.l.b16 %v38
    %v54 = vunpack.c.l.b16 %v39
    %v55 = vunpack.c.l.b16 %v40
    %v56 = vunpack.c.l.b16 %v41
    %v57 = vpack.c.b16 %v54, %v53
    %v58 = vpack.c.b16 %v56, %v55
    %vm61 = vcmask 261120
    %v63 = vsel %vm61, %v37, 0
    %65 = vmatprep.subr.bf16.mxu0 0
    %66 = vmatpush1.bf16.msra.mxu0 0
    %67 = vmatprep.subr.bf16.mxu0 0
    %68 = vmatpush1.bf16.msra.mxu0 0
    %69 = vmatprep.subr.bf16.mxu0 0
    %70 = vmatpush1.bf16.msra.mxu0 0
    %71 = vmatprep.subr.bf16.mxu0 0
    %72 = vmatpush1.bf16.msra.mxu0 0
    %73 = vmatprep.subr.bf16.mxu0 0
    %74 = vmatpush1.bf16.msra.mxu0 0
    %75 = vmatprep.subr.bf16.mxu0 0
    %76 = vmatpush1.bf16.msra.mxu0 0
    %77 = vmatprep.subr.bf16.mxu0 0
    %78 = vmatpush1.bf16.msra.mxu0 %v58
    %79 = vmatprep.subr.bf16.mxu0 0
    %80 = vmatpush1.bf16.msra.mxu0 %v57
    %81 = vmatprep.subr.bf16.mxu0 0
    %82 = vmatpush2.bf16.msra.mxu0 0
    %83 = vmatprep.subr.bf16.mxu0 0
    %84 = vmatpush2.bf16.msra.mxu0 0
    %85 = vmatprep.subr.bf16.mxu0 0
    %86 = vmatpush2.bf16.msra.mxu0 0
    %87 = vmatprep.subr.bf16.mxu0 0
    %88 = vmatpush2.bf16.msra.mxu0 0
    %89 = vmatprep.subr.bf16.mxu0 0
    %90 = vmatpush2.bf16.msra.mxu0 0
    %91 = vmatprep.subr.bf16.mxu0 0
    %92 = vmatpush2.bf16.msra.mxu0 0
    %93 = vmatprep.subr.bf16.mxu0 0
    %94 = vmatpush2.bf16.msra.mxu0 0
    %95 = vmatprep.subr.bf16.mxu0 0
    %96 = vmatpush2.bf16.msra.mxu0 0
    %97 = vmatprep.mubr.bf16.mxu0 0
    %98 = vmatmul.mubr.bf16.gmra.mxu0 %v63
    %v99 = vpop.f32.mrf.mxu0
    %v100 = vadd.f32 %v47, %v99
    %v101 = vpop.f32.mrf.mxu0
    %v102 = vpop.f32.mrf.mxu0
    %v103 = vadd.f32 %v47, %v102
    %v104 = vpop.f32.mrf.mxu0
    %105 = vdwg.mxu0
    %v106 = vmax.f32 %v100, 0.0
    %v107 = vmax.f32 %v103, 0.0
    %v108 = vld [vmem:[#allocation2] sm:$0xff]
    %v109 = vld [vmem:[#allocation2 + $0x8] sm:$0xff]
    %v110 = vpack.c.bf16 %v107, %v106
    %v111 = vld [vmem:[%s3] sm:$0xf]
    %v112 = vld [vmem:[%s3 + $0x4] sm:$0xf]
    %v113 = vld [vmem:[%s3 + $0x8] sm:$0xf]
    %v114 = vld [vmem:[%s3 + $0xc] sm:$0xf]
    %v115 = vld [vmem:[%s3 + $0x10] sm:$0xf]
    %v116 = vld [vmem:[%s3 + $0x14] sm:$0xf]
    %v117 = vld [vmem:[%s3 + $0x18] sm:$0xf]
    %v118 = vld [vmem:[%s3 + $0x1c] sm:$0xf]
    %v119 = vld [vmem:[%s3 + $0x20] sm:$0xf]
    %v120 = vld [vmem:[%s3 + $0x24] sm:$0xf]
    %v121 = vld [vmem:[%s3 + $0x28] sm:$0xf]
    %v122 = vld [vmem:[%s3 + $0x2c] sm:$0xf]
    %v123 = vld [vmem:[%s3 + $0x30] sm:$0xf]
    %v124 = vld [vmem:[%s3 + $0x34] sm:$0xf]
    %v125 = vld [vmem:[%s3 + $0x38] sm:$0xf]
    %v126 = vld [vmem:[%s3 + $0x3c] sm:$0xf]
    %v143 = vunpack.c.l.b16 %v111
    %v144 = vunpack.c.l.b16 %v112
    %v145 = vunpack.c.l.b16 %v113
    %v146 = vunpack.c.l.b16 %v114
    %v147 = vunpack.c.l.b16 %v115
    %v148 = vunpack.c.l.b16 %v116
    %v149 = vunpack.c.l.b16 %v117
    %v150 = vunpack.c.l.b16 %v118
    %v151 = vunpack.c.l.b16 %v119
    %v152 = vunpack.c.l.b16 %v120
    %v153 = vunpack.c.l.b16 %v121
    %v154 = vunpack.c.l.b16 %v122
    %v155 = vunpack.c.l.b16 %v123
    %v156 = vunpack.c.l.b16 %v124
    %v157 = vunpack.c.l.b16 %v125
    %v158 = vunpack.c.l.b16 %v126
    %v159 = vpack.c.b16 %v144, %v143
    %v160 = vpack.c.b16 %v146, %v145
    %v161 = vpack.c.b16 %v148, %v147
    %v162 = vpack.c.b16 %v150, %v149
    %v163 = vpack.c.b16 %v152, %v151
    %v164 = vpack.c.b16 %v154, %v153
    %v165 = vpack.c.b16 %v156, %v155
    %v166 = vpack.c.b16 %v158, %v157
    %175 = vmatprep.subr.bf16.mxu0 0
    %176 = vmatpush1.bf16.msra.mxu0 %v166
    %177 = vmatprep.subr.bf16.mxu0 0
    %178 = vmatpush1.bf16.msra.mxu0 %v165
    %179 = vmatprep.subr.bf16.mxu0 0
    %180 = vmatpush1.bf16.msra.mxu0 %v164
    %181 = vmatprep.subr.bf16.mxu0 0
    %182 = vmatpush1.bf16.msra.mxu0 %v163
    %183 = vmatprep.subr.bf16.mxu0 0
    %184 = vmatpush1.bf16.msra.mxu0 %v162
    %185 = vmatprep.subr.bf16.mxu0 0
    %186 = vmatpush1.bf16.msra.mxu0 %v161
    %187 = vmatprep.subr.bf16.mxu0 0
    %188 = vmatpush1.bf16.msra.mxu0 %v160
    %189 = vmatprep.subr.bf16.mxu0 0
    %190 = vmatpush1.bf16.msra.mxu0 %v159
    %191 = vmatprep.subr.bf16.mxu0 0
    %192 = vmatpush2.bf16.msra.mxu0 0
    %193 = vmatprep.subr.bf16.mxu0 0
    %194 = vmatpush2.bf16.msra.mxu0 0
    %195 = vmatprep.subr.bf16.mxu0 0
    %196 = vmatpush2.bf16.msra.mxu0 0
    %197 = vmatprep.subr.bf16.mxu0 0
    %198 = vmatpush2.bf16.msra.mxu0 0
    %199 = vmatprep.subr.bf16.mxu0 0
    %200 = vmatpush2.bf16.msra.mxu0 0
    %201 = vmatprep.subr.bf16.mxu0 0
    %202 = vmatpush2.bf16.msra.mxu0 0
    %203 = vmatprep.subr.bf16.mxu0 0
    %204 = vmatpush2.bf16.msra.mxu0 0
    %205 = vmatprep.subr.bf16.mxu0 0
    %206 = vmatpush2.bf16.msra.mxu0 0
    %207 = vmatprep.mubr.bf16.mxu0 0
    %208 = vmatmul.mubr.bf16.gmra.mxu0 %v110
    %v209 = vpop.f32.mrf.mxu0
    %v210 = vadd.f32 0.0, %v209
    %v211 = vpop.f32.mrf.mxu0
    %v212 = vpop.f32.mrf.mxu0
    %v213 = vadd.f32 0.0, %v212
    %v214 = vpop.f32.mrf.mxu0
    %215 = vdwg.mxu0
    %v216 = vadd.f32 %v108, %v210
    %v217 = vadd.f32 %v109, %v213
    %218 = vst.msk [vmem:[#allocation2] sm:$0xff] %vm61, %v216
    %219 = vst.msk [vmem:[#allocation2 + $0x8] sm:$0xff] %vm61, %v217
    // Predicated region
    $region34: #{tpu_custom_call.1} parent=1 // pred_check
      %p220 = pneg %p28
    $region35: #{tpu_custom_call.1} parent=1 // pred_check_branch
      %222 = sbr.rel (%p220) target = $region37
    $region36: #{tpu_custom_call.1} parent=1 // pred_region
      %v223 = vld [vmem:[#allocation2] sm:$0xff]
      %v224 = vld [vmem:[#allocation2 + $0x8] sm:$0xff]
      %v225 = vld [vmem:[%s4] sm:$0x1]
      %v227 = vlaneseq
      %v228 = vshrl.u32 %v227, 7
      %v229 = vsub.s32 0, %v228
      %v230 = vrot.slane %v225, %v229
      %v232 = vadd.f32 %v223, %v230
      %v233 = vadd.f32 %v224, %v230
      %v234 = vadd.f32 %v232, %v35
      %v235 = vadd.f32 %v233, %v36
      %v236 = vsel %vm61, %v234, 0.0
      %237 = vadd.xlane.f32.xlu0 %v236
      %v238 = vpop.xlane.xlu0 %237
      %v239 = vsel %vm61, %v235, 0.0
      %240 = vadd.xlane.f32.xlu0 %v239
      %v241 = vpop.xlane.xlu0 %240
      %v242 = vrcp.pop 32.0
      %v243 = vmul.f32 %v238, %v242
      %v244 = vmul.f32 %v241, %v242
      %v245 = vsub.f32 %v234, %v243
      %v246 = vsub.f32 %v235, %v244
      %v247 = vmul.f32 %v245, %v245
      %v248 = vmul.f32 %v246, %v246
      %v249 = vsel %vm61, %v247, 0.0
      %250 = vadd.xlane.f32.xlu0 %v249
      %v251 = vpop.xlane.xlu0 %250
      %v252 = vsel %vm61, %v248, 0.0
      %253 = vadd.xlane.f32.xlu0 %v252
      %v254 = vpop.xlane.xlu0 %253
      %v255 = vmul.f32 %v251, %v242
      %v256 = vmul.f32 %v254, %v242
      %v257 = vadd.f32 %v255, 1e-05
      %v258 = vadd.f32 %v256, 1e-05
      %v259 = vrsqrt.pop %v257
      %v260 = vrsqrt.pop %v258
      %v261 = vmul.f32 %v245, %v259
      %v262 = vmul.f32 %v246, %v260
      %v263 = vld [vmem:[%s5] sm:$0x1]
      %v265 = vlaneseq
      %v266 = vshrl.u32 %v265, 7
      %v267 = vsub.s32 0, %v266
      %v268 = vrot.slane %v263, %v267
      %v270 = vmul.f32 %v261, %v268
      %v271 = vmul.f32 %v262, %v268
      %v272 = vld [vmem:[%s6] sm:$0x1]
      %v274 = vlaneseq
      %v275 = vshrl.u32 %v274, 7
      %v276 = vsub.s32 0, %v275
      %v277 = vrot.slane %v272, %v276
      %v279 = vadd.f32 %v270, %v277
      %v280 = vadd.f32 %v271, %v277
      %281 = vst.msk [vmem:[#allocation3] sm:$0xff] %vm61, %v279
      %282 = vst.msk [vmem:[#allocation3 + $0x8] sm:$0xff] %vm61, %v280
    $region37: #{tpu_custom_call.1} parent=1 // pred_fallthru
      _
    // Predicated region
    $region38: #{tpu_custom_call.1} parent=1 // pred_check
      _
    $region39: #{tpu_custom_call.1} parent=1 // pred_check_branch
      %284 = sbr.rel (0) target = $region41
    $region40: #{tpu_custom_call.1} parent=1 // pred_region
      %s286 = ssub.s32 256, 256
      %287 = vsyncadd [#allocation4], %s286
      %s288 = sshll.u32 [#allocation3], 4
      %s289 = int_to_ptr.vmem [resolvable:$true] %s288
      %294 = dma.vmem_to_hbm [thread:$0]  %s289, 256, %s7, [#allocation4], 128, 128, 8
    $region41: #{tpu_custom_call.1} parent=1 // pred_fallthru
      _
    // Predicated region
    $region42: #{tpu_custom_call.1} parent=1 // pred_check
      _
    $region43: #{tpu_custom_call.1} parent=1 // pred_check_branch
      %296 = sbr.rel (0) target = $region45
    $region44: #{tpu_custom_call.1} parent=1 // pred_region
      %297 = dma.done [#allocation4], 256
    $region45: #{tpu_custom_call.1} parent=1 // pred_fallthru
      _
    %298 = vsyncpa [#allocation4], 1

</llo_original>
